<compile_context>
chip_gen: v7x
topology: tpu7x:2x2x1
jax: 0.10.0
libtpu: 0.0.40
codegen_flags: <defaults>
</compile_context>

<pallas_src>
import numpy as np
import jax
import jax.numpy as jnp
from jax.experimental import pallas as pl
from jax.experimental.pallas import tpu as pltpu


def make_dino_loss_kernel(ncrops, batch_per_crop, student_temp, center_momentum):
    B = batch_per_crop
    inv_student_temp = 1.0 / student_temp
    n_terms = 2 * (ncrops - 1)
    inv_b_nterms = 1.0 / (B * n_terms)

    def kernel(scalar_ref,          # SMEM (1,): [1 / teacher_temp]
               student_ref,         # VMEM (B, D)   student logits, crop v
               teacher_ref,         # VMEM (2B, D)  teacher logits (resident)
               center_ref,          # VMEM (1, D)   current center (resident)
               loss_ref,            # VMEM (1, 1)   scalar loss
               new_center_ref,      # VMEM (1, D)   EMA-updated center
               q_scratch,           # VMEM (2B, D)  cached teacher softmax
               qsum_scratch,        # VMEM (B, D)   cached q0 + q1
               acc_scratch):        # VMEM (B, 1)   per-row CE accumulator
        v = pl.program_id(0)

        @pl.when(v == 0)
        def _init():
            inv_temp = scalar_ref[0]
            # teacher softmax((t - center) * inv_temp) with no (2B, D) divide
            t = (teacher_ref[...] - center_ref[...]) * inv_temp
            t = t - jnp.max(t, axis=-1, keepdims=True)
            te = jnp.exp(t)
            denom = jnp.sum(te, axis=-1, keepdims=True)              # (2B, 1)
            q = te * pl.reciprocal(denom, approx=False)
            q_scratch[...] = q
            qsum_scratch[...] = q[0:B, :] + q[B:2 * B, :]
            acc_scratch[...] = jnp.zeros_like(acc_scratch)

            # center EMA update (in-place via input/output aliasing).
            bc = jnp.sum(teacher_ref[...], axis=0, keepdims=True) * (1.0 / (2 * B))
            new_center_ref[...] = (center_ref[...] * center_momentum
                                   + bc * (1.0 - center_momentum))

        # Student log-sum-exp per row (no (B, D) log-prob materialization).
        x = student_ref[...]                                         # (B, D)
        mx = jnp.max(x, axis=-1, keepdims=True)                      # (B, 1)
        e = jnp.exp((x - mx) * inv_student_temp)
        z = jnp.sum(e, axis=-1, keepdims=True)                       # (B, 1)
        logz = mx * inv_student_temp + jnp.log(z)                    # (B, 1)

        # Effective teacher distribution for this crop:
        #   v == 0 -> q1 ; v == 1 -> q0 ; v >= 2 -> q0 + q1 (two CE terms fused)
        # CE contribution: Qw * logz - (1/T) * sum_d(q_eff * x)
        @pl.when(v == 0)
        def _crop0():
            dot = jnp.sum(q_scratch[B:2 * B, :] * x, axis=-1, keepdims=True)
            acc_scratch[...] += logz - dot * inv_student_temp

        @pl.when(v == 1)
        def _crop1():
            dot = jnp.sum(q_scratch[0:B, :] * x, axis=-1, keepdims=True)
            acc_scratch[...] += logz - dot * inv_student_temp

        @pl.when(v >= 2)
        def _crops_rest():
            dot = jnp.sum(qsum_scratch[...] * x, axis=-1, keepdims=True)
            acc_scratch[...] += 2.0 * logz - dot * inv_student_temp

        @pl.when(v == ncrops - 1)
        def _finalize():
            total = jnp.sum(acc_scratch[...]) * inv_b_nterms
            loss_ref[...] = jnp.full((1, 1), total, dtype=jnp.float32)

    return kernel


class DINOLossPallas:
    def __init__(self, out_dim, ncrops, warmup_teacher_temp, teacher_temp,
                 warmup_teacher_temp_epochs, nepochs,
                 student_temp=0.1, center_momentum=0.9):
        self.out_dim = out_dim
        self.ncrops = ncrops
        self.student_temp = student_temp
        self.center_momentum = center_momentum
        # buffer: center = zeros(1, out_dim)
        self.center = jnp.zeros((1, out_dim), jnp.float32)
        self.teacher_temp_schedule = np.concatenate((
            np.linspace(warmup_teacher_temp, teacher_temp,
                        warmup_teacher_temp_epochs),
            np.ones(nepochs - warmup_teacher_temp_epochs) * teacher_temp))

    def __call__(self, student_output, teacher_output, epoch):
        ncrops = self.ncrops
        D = self.out_dim
        B = teacher_output.shape[0] // 2
        assert student_output.shape == (ncrops * B, D)
        assert teacher_output.shape == (2 * B, D)

        inv_temp = jnp.asarray(
            [1.0 / float(self.teacher_temp_schedule[epoch])], dtype=jnp.float32)

        kernel = make_dino_loss_kernel(
            ncrops, B, self.student_temp, self.center_momentum)

        grid_spec = pltpu.PrefetchScalarGridSpec(
            num_scalar_prefetch=1,
            grid=(ncrops,),
            in_specs=[
                pl.BlockSpec((B, D), lambda v, s: (v, 0)),        # student crop v
                pl.BlockSpec((2 * B, D), lambda v, s: (0, 0)),    # teacher (resident)
                pl.BlockSpec((1, D), lambda v, s: (0, 0)),        # center  (resident)
            ],
            out_specs=(
                pl.BlockSpec((1, 1), lambda v, s: (0, 0)),        # loss
                pl.BlockSpec((1, D), lambda v, s: (0, 0)),        # new center
            ),
            scratch_shapes=[
                pltpu.VMEM((2 * B, D), jnp.float32),              # teacher softmax q
                pltpu.VMEM((B, D), jnp.float32),                  # q0 + q1
                pltpu.VMEM((B, 1), jnp.float32),                  # per-row CE accum
            ],
        )

        cost = pl.CostEstimate(
            flops=int((16 + 5 * ncrops) * B * D),
            transcendentals=int((2 + ncrops) * B * D),
            bytes_accessed=int(4 * ((ncrops + 2) * B * D + 2 * D + 1)),
        )

        loss, new_center = pl.pallas_call(
            kernel,
            out_shape=(jax.ShapeDtypeStruct((1, 1), jnp.float32),
                       jax.ShapeDtypeStruct((1, D), jnp.float32)),
            grid_spec=grid_spec,
            compiler_params=pltpu.CompilerParams(
                dimension_semantics=("arbitrary",),
                vmem_limit_bytes=32 * 1024 * 1024),
            cost_estimate=cost,
            # operand indices include the scalar-prefetch arg: center is input 3,
            # aliased onto output 1 (new center) for an in-place EMA update.
            input_output_aliases={3: 1},
        )(inv_temp, student_output, teacher_output, self.center)

        # side effect of forward(): update the center buffer
        self.center = new_center
        return loss[0, 0]


def _reference_dino_loss(student_output, teacher_output, center, temp,
                         ncrops, student_temp):
    """Pure-JAX reference mirroring the PyTorch forward."""
    student_out = student_output / student_temp
    student_chunks = jnp.split(student_out, ncrops, axis=0)
    teacher_out = jax.nn.softmax((teacher_output - center) / temp, axis=-1)
    teacher_chunks = jnp.split(teacher_out, 2, axis=0)
    total, n = 0.0, 0
    for iq, q in enumerate(teacher_chunks):
        for v in range(ncrops):
            if v == iq:
                continue
            loss = jnp.sum(-q * jax.nn.log_softmax(student_chunks[v], axis=-1),
                           axis=-1)
            total = total + jnp.mean(loss)
            n += 1
    return total / n


if __name__ == "__main__":
    # Small but TPU-friendly shapes: out_dim multiple of 128, rows multiple of 8.
    out_dim = 128
    ncrops = 4
    B = 8                      # batch per crop
    epoch = 1

    key = jax.random.PRNGKey(0)
    k1, k2 = jax.random.split(key)
    student_output = jax.random.normal(k1, (ncrops * B, out_dim), jnp.float32)
    teacher_output = jax.random.normal(k2, (2 * B, out_dim), jnp.float32)

    dino = DINOLossPallas(out_dim=out_dim, ncrops=ncrops,
                          warmup_teacher_temp=0.04, teacher_temp=0.07,
                          warmup_teacher_temp_epochs=3, nepochs=10,
                          student_temp=0.1, center_momentum=0.9)

    # host snapshot BEFORE the call: the center buffer is aliased/donated
    center_before = np.asarray(dino.center)

    loss = dino(student_output, teacher_output, epoch)
    loss = jax.block_until_ready(loss)
    new_center = jax.block_until_ready(dino.center)

    # sanity check against pure-JAX reference
    temp = float(dino.teacher_temp_schedule[epoch])
    ref_loss = _reference_dino_loss(student_output, teacher_output,
                                    center_before, temp, ncrops, 0.1)
    ref_center = (center_before * 0.9
                  + (np.sum(np.asarray(teacher_output), axis=0, keepdims=True)
                     / teacher_output.shape[0]) * 0.1)
    np.testing.assert_allclose(np.asarray(loss), np.asarray(ref_loss),
                               rtol=1e-3, atol=1e-4)
    np.testing.assert_allclose(np.asarray(new_center), np.asarray(ref_center),
                               rtol=1e-3, atol=1e-5)

    print("KERNEL_OK")
</pallas_src>

<mosaic_0001>
module attributes {stable_mosaic.version = 11 : i64} {
  func.func @kernel(%arg0: i32, %arg1: memref<1xf32, #tpu.memory_space<smem>>, %arg2: memref<8x128xf32, #tpu.memory_space<vmem>>, %arg3: memref<16x128xf32, #tpu.memory_space<vmem>>, %arg4: memref<1x128xf32, #tpu.memory_space<vmem>>, %arg5: memref<1x1xf32, #tpu.memory_space<vmem>>, %arg6: memref<1x128xf32, #tpu.memory_space<vmem>>, %arg7: memref<16x128xf32, #tpu.memory_space<vmem>>, %arg8: memref<8x128xf32, #tpu.memory_space<vmem>>, %arg9: memref<8x1xf32, #tpu.memory_space<vmem>>) attributes {dimension_semantics = [#tpu.dimension_semantics<arbitrary>], iteration_bounds = array<i64: 4>, scalar_prefetch = 1 : i64, scratch_operands = 3 : i64, tpu.core_type = #tpu.core_type<tc>, window_params = [{transform_indices = @transform_0, window_bounds = array<i64: 8, 128>}, {pipeline_mode = #tpu.pipeline_mode<synchronous>, transform_indices = @transform_1, window_bounds = array<i64: 16, 128>}, {pipeline_mode = #tpu.pipeline_mode<synchronous>, transform_indices = @transform_2, window_bounds = array<i64: 1, 128>}, {pipeline_mode = #tpu.pipeline_mode<synchronous>, transform_indices = @transform_3, window_bounds = array<i64: 1, 1>}, {pipeline_mode = #tpu.pipeline_mode<synchronous>, transform_indices = @transform_4, window_bounds = array<i64: 1, 128>}]} {
    %c0_i32 = arith.constant 0 : i32
    %0 = arith.cmpi eq, %arg0, %c0_i32 : i32
    %1 = arith.extui %0 : i1 to i32
    %c0_i32_0 = arith.constant 0 : i32
    %2 = arith.cmpi ne, %1, %c0_i32_0 : i32
    scf.if %2 {
      %c0_10 = arith.constant 0 : index
      %29 = memref.load %arg1[%c0_10] : memref<1xf32, #tpu.memory_space<smem>>
      %c0_11 = arith.constant 0 : index
      %c0_12 = arith.constant 0 : index
      %30 = vector.load %arg3[%c0_11, %c0_12] : memref<16x128xf32, #tpu.memory_space<vmem>>, vector<16x128xf32>
      %c0_13 = arith.constant 0 : index
      %c0_14 = arith.constant 0 : index
      %31 = vector.load %arg4[%c0_13, %c0_14] : memref<1x128xf32, #tpu.memory_space<vmem>>, vector<1x128xf32>
      %32 = vector.broadcast %31 : vector<1x128xf32> to vector<16x128xf32>
      %33 = arith.subf %30, %32 : vector<16x128xf32>
      %34 = vector.broadcast %29 : f32 to vector<16x128xf32>
      %35 = arith.mulf %33, %34 : vector<16x128xf32>
      %cst_15 = arith.constant dense<0xFF800000> : vector<16xf32>
      %36 = vector.multi_reduction <maximumf>, %35, %cst_15 [1] : vector<16x128xf32> to vector<16xf32>
      %37 = vector.shape_cast %36 : vector<16xf32> to vector<16x1xf32>
      %38 = vector.broadcast %37 : vector<16x1xf32> to vector<16x128xf32>
      %39 = arith.subf %35, %38 : vector<16x128xf32>
      %40 = math.exp %39 : vector<16x128xf32>
      %cst_16 = arith.constant dense<0.000000e+00> : vector<16xf32>
      %41 = vector.multi_reduction <add>, %40, %cst_16 [1] : vector<16x128xf32> to vector<16xf32>
      %42 = vector.shape_cast %41 : vector<16xf32> to vector<16x1xf32>
      %43 = tpu.reciprocal %42 : vector<16x1xf32> -> vector<16x1xf32>
      %44 = vector.broadcast %43 : vector<16x1xf32> to vector<16x128xf32>
      %45 = arith.mulf %40, %44 : vector<16x128xf32>
      %c0_17 = arith.constant 0 : index
      %c0_18 = arith.constant 0 : index
      %46 = vector.load %arg7[%c0_17, %c0_18] : memref<16x128xf32, #tpu.memory_space<vmem>>, vector<16x128xf32>
      tpu.vector_store %arg7[%c0_17, %c0_18], %45 {strides = array<i32>} : memref<16x128xf32, #tpu.memory_space<vmem>>, vector<16x128xf32>,
      %47 = vector.extract_strided_slice %45 {offsets = [0, 0], sizes = [8, 128], strides = [1, 1]} : vector<16x128xf32> to vector<8x128xf32>
      %48 = vector.extract_strided_slice %45 {offsets = [8, 0], sizes = [8, 128], strides = [1, 1]} : vector<16x128xf32> to vector<8x128xf32>
      %49 = arith.addf %47, %48 : vector<8x128xf32>
      %c0_19 = arith.constant 0 : index
      %c0_20 = arith.constant 0 : index
      %50 = vector.load %arg8[%c0_19, %c0_20] : memref<8x128xf32, #tpu.memory_space<vmem>>, vector<8x128xf32>
      tpu.vector_store %arg8[%c0_19, %c0_20], %49 {strides = array<i32>} : memref<8x128xf32, #tpu.memory_space<vmem>>, vector<8x128xf32>,
      %cst_21 = arith.constant 0.000000e+00 : f32
      %51 = vector.broadcast %cst_21 : f32 to vector<8x1xf32>
      %c0_22 = arith.constant 0 : index
      %c0_23 = arith.constant 0 : index
      %52 = vector.load %arg9[%c0_22, %c0_23] : memref<8x1xf32, #tpu.memory_space<vmem>>, vector<8x1xf32>
      tpu.vector_store %arg9[%c0_22, %c0_23], %51 {strides = array<i32>} : memref<8x1xf32, #tpu.memory_space<vmem>>, vector<8x1xf32>,
      %c0_24 = arith.constant 0 : index
      %c0_25 = arith.constant 0 : index
      %53 = vector.load %arg3[%c0_24, %c0_25] : memref<16x128xf32, #tpu.memory_space<vmem>>, vector<16x128xf32>
      %cst_26 = arith.constant dense<0.000000e+00> : vector<128xf32>
      %54 = vector.multi_reduction <add>, %53, %cst_26 [0] : vector<16x128xf32> to vector<128xf32>
      %55 = vector.shape_cast %54 : vector<128xf32> to vector<1x128xf32>
      %cst_27 = arith.constant 6.250000e-02 : f32
      %56 = vector.broadcast %cst_27 : f32 to vector<1x128xf32>
      %57 = arith.mulf %55, %56 : vector<1x128xf32>
      %c0_28 = arith.constant 0 : index
      %c0_29 = arith.constant 0 : index
      %58 = vector.load %arg4[%c0_28, %c0_29] : memref<1x128xf32, #tpu.memory_space<vmem>>, vector<1x128xf32>
      %cst_30 = arith.constant 0.899999976 : f32
      %59 = vector.broadcast %cst_30 : f32 to vector<1x128xf32>
      %60 = arith.mulf %58, %59 : vector<1x128xf32>
      %cst_31 = arith.constant 1.000000e-01 : f32
      %61 = vector.broadcast %cst_31 : f32 to vector<1x128xf32>
      %62 = arith.mulf %57, %61 : vector<1x128xf32>
      %63 = arith.addf %60, %62 : vector<1x128xf32>
      %c0_32 = arith.constant 0 : index
      %c0_33 = arith.constant 0 : index
      %64 = vector.load %arg6[%c0_32, %c0_33] : memref<1x128xf32, #tpu.memory_space<vmem>>, vector<1x128xf32>
      tpu.vector_store %arg6[%c0_32, %c0_33], %63 {strides = array<i32>} : memref<1x128xf32, #tpu.memory_space<vmem>>, vector<1x128xf32>,
    } else {
    }
    %c0 = arith.constant 0 : index
    %c0_1 = arith.constant 0 : index
    %3 = vector.load %arg2[%c0, %c0_1] : memref<8x128xf32, #tpu.memory_space<vmem>>, vector<8x128xf32>
    %cst = arith.constant dense<0xFF800000> : vector<8xf32>
    %4 = vector.multi_reduction <maximumf>, %3, %cst [1] : vector<8x128xf32> to vector<8xf32>
    %5 = vector.shape_cast %4 : vector<8xf32> to vector<8x1xf32>
    %6 = vector.broadcast %5 : vector<8x1xf32> to vector<8x128xf32>
    %7 = arith.subf %3, %6 : vector<8x128xf32>
    %cst_2 = arith.constant 1.000000e+01 : f32
    %8 = vector.broadcast %cst_2 : f32 to vector<8x128xf32>
    %9 = arith.mulf %7, %8 : vector<8x128xf32>
    %10 = math.exp %9 : vector<8x128xf32>
    %cst_3 = arith.constant dense<0.000000e+00> : vector<8xf32>
    %11 = vector.multi_reduction <add>, %10, %cst_3 [1] : vector<8x128xf32> to vector<8xf32>
    %12 = vector.shape_cast %11 : vector<8xf32> to vector<8x1xf32>
    %cst_4 = arith.constant 1.000000e+01 : f32
    %13 = vector.broadcast %cst_4 : f32 to vector<8x1xf32>
    %14 = arith.mulf %5, %13 : vector<8x1xf32>
    %15 = math.log %12 : vector<8x1xf32>
    %16 = arith.addf %14, %15 : vector<8x1xf32>
    %c0_i32_5 = arith.constant 0 : i32
    %17 = arith.cmpi eq, %arg0, %c0_i32_5 : i32
    %18 = arith.extui %17 : i1 to i32
    %c0_i32_6 = arith.constant 0 : i32
    %19 = arith.cmpi ne, %18, %c0_i32_6 : i32
    scf.if %19 {
      %c8 = arith.constant 8 : index
      %c0_10 = arith.constant 0 : index
      %29 = vector.load %arg7[%c8, %c0_10] : memref<16x128xf32, #tpu.memory_space<vmem>>, vector<8x128xf32>
      %30 = arith.mulf %29, %3 : vector<8x128xf32>
      %cst_11 = arith.constant dense<0.000000e+00> : vector<8xf32>
      %31 = vector.multi_reduction <add>, %30, %cst_11 [1] : vector<8x128xf32> to vector<8xf32>
      %32 = vector.shape_cast %31 : vector<8xf32> to vector<8x1xf32>
      %c0_12 = arith.constant 0 : index
      %c0_13 = arith.constant 0 : index
      %33 = vector.load %arg9[%c0_12, %c0_13] : memref<8x1xf32, #tpu.memory_space<vmem>>, vector<8x1xf32>
      %cst_14 = arith.constant 1.000000e+01 : f32
      %34 = vector.broadcast %cst_14 : f32 to vector<8x1xf32>
      %35 = arith.mulf %32, %34 : vector<8x1xf32>
      %36 = arith.subf %16, %35 : vector<8x1xf32>
      %37 = arith.addf %33, %36 : vector<8x1xf32>
      %c0_15 = arith.constant 0 : index
      %c0_16 = arith.constant 0 : index
      %38 = vector.load %arg9[%c0_15, %c0_16] : memref<8x1xf32, #tpu.memory_space<vmem>>, vector<8x1xf32>
      tpu.vector_store %arg9[%c0_15, %c0_16], %37 {strides = array<i32>} : memref<8x1xf32, #tpu.memory_space<vmem>>, vector<8x1xf32>,
    } else {
    }
    %c1_i32 = arith.constant 1 : i32
    %20 = arith.cmpi eq, %arg0, %c1_i32 : i32
    %21 = arith.extui %20 : i1 to i32
    %c0_i32_7 = arith.constant 0 : i32
    %22 = arith.cmpi ne, %21, %c0_i32_7 : i32
    scf.if %22 {
      %c0_10 = arith.constant 0 : index
      %c0_11 = arith.constant 0 : index
      %29 = vector.load %arg7[%c0_10, %c0_11] : memref<16x128xf32, #tpu.memory_space<vmem>>, vector<8x128xf32>
      %30 = arith.mulf %29, %3 : vector<8x128xf32>
      %cst_12 = arith.constant dense<0.000000e+00> : vector<8xf32>
      %31 = vector.multi_reduction <add>, %30, %cst_12 [1] : vector<8x128xf32> to vector<8xf32>
      %32 = vector.shape_cast %31 : vector<8xf32> to vector<8x1xf32>
      %c0_13 = arith.constant 0 : index
      %c0_14 = arith.constant 0 : index
      %33 = vector.load %arg9[%c0_13, %c0_14] : memref<8x1xf32, #tpu.memory_space<vmem>>, vector<8x1xf32>
      %cst_15 = arith.constant 1.000000e+01 : f32
      %34 = vector.broadcast %cst_15 : f32 to vector<8x1xf32>
      %35 = arith.mulf %32, %34 : vector<8x1xf32>
      %36 = arith.subf %16, %35 : vector<8x1xf32>
      %37 = arith.addf %33, %36 : vector<8x1xf32>
      %c0_16 = arith.constant 0 : index
      %c0_17 = arith.constant 0 : index
      %38 = vector.load %arg9[%c0_16, %c0_17] : memref<8x1xf32, #tpu.memory_space<vmem>>, vector<8x1xf32>
      tpu.vector_store %arg9[%c0_16, %c0_17], %37 {strides = array<i32>} : memref<8x1xf32, #tpu.memory_space<vmem>>, vector<8x1xf32>,
    } else {
    }
    %c2_i32 = arith.constant 2 : i32
    %23 = arith.cmpi sge, %arg0, %c2_i32 : i32
    %24 = arith.extui %23 : i1 to i32
    %c0_i32_8 = arith.constant 0 : i32
    %25 = arith.cmpi ne, %24, %c0_i32_8 : i32
    scf.if %25 {
      %c0_10 = arith.constant 0 : index
      %c0_11 = arith.constant 0 : index
      %29 = vector.load %arg8[%c0_10, %c0_11] : memref<8x128xf32, #tpu.memory_space<vmem>>, vector<8x128xf32>
      %30 = arith.mulf %29, %3 : vector<8x128xf32>
      %cst_12 = arith.constant dense<0.000000e+00> : vector<8xf32>
      %31 = vector.multi_reduction <add>, %30, %cst_12 [1] : vector<8x128xf32> to vector<8xf32>
      %32 = vector.shape_cast %31 : vector<8xf32> to vector<8x1xf32>
      %c0_13 = arith.constant 0 : index
      %c0_14 = arith.constant 0 : index
      %33 = vector.load %arg9[%c0_13, %c0_14] : memref<8x1xf32, #tpu.memory_space<vmem>>, vector<8x1xf32>
      %cst_15 = arith.constant 2.000000e+00 : f32
      %34 = vector.broadcast %cst_15 : f32 to vector<8x1xf32>
      %35 = arith.mulf %34, %16 : vector<8x1xf32>
      %cst_16 = arith.constant 1.000000e+01 : f32
      %36 = vector.broadcast %cst_16 : f32 to vector<8x1xf32>
      %37 = arith.mulf %32, %36 : vector<8x1xf32>
      %38 = arith.subf %35, %37 : vector<8x1xf32>
      %39 = arith.addf %33, %38 : vector<8x1xf32>
      %c0_17 = arith.constant 0 : index
      %c0_18 = arith.constant 0 : index
      %40 = vector.load %arg9[%c0_17, %c0_18] : memref<8x1xf32, #tpu.memory_space<vmem>>, vector<8x1xf32>
      tpu.vector_store %arg9[%c0_17, %c0_18], %39 {strides = array<i32>} : memref<8x1xf32, #tpu.memory_space<vmem>>, vector<8x1xf32>,
    } else {
    }
    %c3_i32 = arith.constant 3 : i32
    %26 = arith.cmpi eq, %arg0, %c3_i32 : i32
    %27 = arith.extui %26 : i1 to i32
    %c0_i32_9 = arith.constant 0 : i32
    %28 = arith.cmpi ne, %27, %c0_i32_9 : i32
    scf.if %28 {
      %c0_10 = arith.constant 0 : index
      %c0_11 = arith.constant 0 : index
      %29 = vector.load %arg9[%c0_10, %c0_11] : memref<8x1xf32, #tpu.memory_space<vmem>>, vector<8x1xf32>
      %30 = vector.shape_cast %29 : vector<8x1xf32> to vector<1x8x1xf32>
      %cst_12 = arith.constant dense<0.000000e+00> : vector<1xf32>
      %31 = vector.multi_reduction <add>, %30, %cst_12 [1, 2] : vector<1x8x1xf32> to vector<1xf32>
      %32 = vector.shape_cast %31 : vector<1xf32> to vector<1x1x1xf32>
      %33 = vector.extract %32[0, 0, 0] : f32 from vector<1x1x1xf32>
      %cst_13 = arith.constant 0.020833334 : f32
      %34 = arith.mulf %33, %cst_13 : f32
      %35 = vector.broadcast %34 : f32 to vector<1x1xf32>
      %c0_14 = arith.constant 0 : index
      %c0_15 = arith.constant 0 : index
      %36 = vector.load %arg5[%c0_14, %c0_15] : memref<1x1xf32, #tpu.memory_space<vmem>>, vector<1x1xf32>
      tpu.vector_store %arg5[%c0_14, %c0_15], %35 {strides = array<i32>} : memref<1x1xf32, #tpu.memory_space<vmem>>, vector<1x1xf32>,
    } else {
    }
    return
  }
  func.func @transform_0(%arg0: i32, %arg1: memref<1xf32, #tpu.memory_space<smem>>) -> (i32, i32) {
    %c0_i32 = arith.constant 0 : i32
    %c0_i32_0 = arith.constant 0 : i32
    return %arg0, %c0_i32 : i32, i32
  }
  func.func @transform_1(%arg0: i32, %arg1: memref<1xf32, #tpu.memory_space<smem>>) -> (i32, i32) {
    %c0_i32 = arith.constant 0 : i32
    %c0_i32_0 = arith.constant 0 : i32
    %c0_i32_1 = arith.constant 0 : i32
    return %c0_i32, %c0_i32_0 : i32, i32
  }
  func.func @transform_2(%arg0: i32, %arg1: memref<1xf32, #tpu.memory_space<smem>>) -> (i32, i32) {
    %c0_i32 = arith.constant 0 : i32
    %c0_i32_0 = arith.constant 0 : i32
    %c0_i32_1 = arith.constant 0 : i32
    return %c0_i32, %c0_i32_0 : i32, i32
  }
  func.func @transform_3(%arg0: i32, %arg1: memref<1xf32, #tpu.memory_space<smem>>) -> (i32, i32) {
    %c0_i32 = arith.constant 0 : i32
    %c0_i32_0 = arith.constant 0 : i32
    %c0_i32_1 = arith.constant 0 : i32
    return %c0_i32, %c0_i32_0 : i32, i32
  }
  func.func @transform_4(%arg0: i32, %arg1: memref<1xf32, #tpu.memory_space<smem>>) -> (i32, i32) {
    %c0_i32 = arith.constant 0 : i32
    %c0_i32_0 = arith.constant 0 : i32
    %c0_i32_1 = arith.constant 0 : i32
    return %c0_i32, %c0_i32_0 : i32, i32
  }
}

</mosaic_0001>

<llo_original>
// kernel: tpu_custom_call.1
$region0: #{tpu_custom_call.1}
  #allocation0 [shape = 'u32[]', space=smem, size = 0x4, offset = 0x4, fixed_abs, tag = 'smem constant byte address 0x4 - core index']
  #allocation1 [shape = 'u32[144,128]{1,0:T(1,128)}', space=vmem, size = 0x12000, scoped, tag = 'internal scratch']
  #allocation2 [shape = 'f32[16,128]{1,0:T(8,128)}', space=vmem, size = 0x2000, scoped, tag = 'scratch operand']
  #allocation3 [shape = 'f32[8,128]{1,0:T(8,128)}', space=vmem, size = 0x1000, scoped, tag = 'scratch operand']
  #allocation4 [shape = 'f32[8,1]{1,0:T(8,128)}', space=vmem, size = 0x1000, scoped, tag = 'scratch operand']
  #allocation5 [shape = 's32[1]{0}', space=sflag, size = 0x4, scoped, tag = 'scoped memory for tpu_custom_call.1']
  #allocation6 [shape = 'f32[1]{0:T(128)S(6)}', space=smem, size = 0x200, scoped, tag = 'prefetched SMEM operand 0']
  %s0 = inlined_call_operand.<no memory space> [shape: f32[1], index: 0, kind: input, shape index: {}]
  %s1 = inlined_call_operand.hbm [shape: f32[32,128], index: 1, kind: input, shape index: {}]
  %s2 = inlined_call_operand.hbm [shape: f32[16,128], index: 2, kind: input, shape index: {}]
  %s3 = inlined_call_operand.hbm [shape: f32[1,128], index: 3, kind: input, shape index: {}, may-alias: {3,5}]
  %s4 = inlined_call_operand.hbm [shape: f32[1,1], index: 4, kind: output, shape index: {0}]
  %s5 = inlined_call_operand.hbm [shape: f32[1,128], index: 5, kind: output, shape index: {1}, may-alias: {3,5}]
  %6 = xla_tuple %s4, %s5
  %s7 = sld [smem:[#allocation0]]
  $region85: #{tpu_custom_call.1} parent=0
    _
  %s9 = ssub.s32 1, %s7
  %s10 = scalar_select 0, %s9, %s7
  %11 = sst [smem:[#allocation6]] %s0
  $region1: #{tpu_custom_call.1} parent=0
    #allocation7 [shape = 'u8[8192]{0}', space=vmem, size = 0x2000, scoped, tag = 'input window, operand 1']
    #allocation8 [shape = 's32[2]{0}', space=sflag, size = 0x8, scoped, tag = 'scoped memory for tpu_custom_call.1']
    #allocation9 [shape = 's32[2]{0}', space=sflag, size = 0x8, scoped, tag = 'scoped memory for tpu_custom_call.1']
    #allocation10 [shape = 'u8[8192]{0}', space=vmem, size = 0x2000, scoped, tag = 'input window, operand 2, single buffered']
    #allocation11 [shape = 's32[1]{0}', space=sflag, size = 0x4, scoped, tag = 'scoped memory for tpu_custom_call.1']
    #allocation12 [shape = 'u8[512]{0}', space=vmem, size = 0x400, scoped, tag = 'input window, operand 3, single buffered']
    #allocation13 [shape = 'u8[512]{0}', space=vmem, size = 0x400, scoped, tag = 'output window, operand 0, single buffered']
    #allocation14 [shape = 'u8[512]{0}', space=vmem, size = 0x400, scoped, tag = 'output window, operand 1, single buffered']
    #allocation15 [shape = 's32[1]{0}', space=sflag, size = 0x4, scoped, tag = 'scoped memory for tpu_custom_call.1']
    %12 = vsyncpa [#allocation8], 0
    %s13 = scalar_lea.sflag [#allocation8], 1
    %14 = vsyncpa %s13, 0
    %15 = vsyncpa [#allocation11], 0
    %16 = vsyncpa [#allocation9], 0
    %17 = vsyncpa [#allocation15], 0
    loop: start=0, step=1, limit=6
    $region2: #{tpu_custom_call.1} parent=1 // loop_pre_header
      _
    $region3: #{tpu_custom_call.1} parent=1 // loop_header
      %s19 = sphi 0, %s23
      %p20 = scmp.ge.s32.totalorder %s19, 6
      %s29 = sphi 0, %s31
      %s32 = sphi 0, %s29
      %s33 = sphi 0, %s32
      %s49 = sphi 0, %s33
      %s53 = sphi 0, %s53
      %s55 = sphi 0, %s53
      %s56 = sphi 0, %s55
      %s70 = sphi 0, %s56
      %s74 = sphi 0, %s74
      %s76 = sphi 0, %s74
      %s77 = sphi 0, %s76
      %s91 = sphi 0, %s77
      %s95 = sphi 0, %s95
      %s97 = sphi 0, %s95
      %s98 = sphi 0, %s97
      %s112 = sphi 0, %s98
      %s116 = sphi 0, %s116
      %s118 = sphi 0, %s116
      %s119 = sphi 0, %s118
      %s133 = sphi 0, %s119
    $region4: #{tpu_custom_call.1} parent=1 // loop_header_branch
      %22 = sbr.rel (%p20) target = $region8
    $region5: #{tpu_custom_call.1} parent=1 // loop_body
      %s24 = ssub.s32 %s19, 1
      %s25 = ssub.s32 %s19, 2
      %s26 = sadd.s32 %s19, 1
      %s27 = ssub.s32 %s19, %s26
      %p28 = scmp.eq.s32.totalorder %s27, 0
      %s30 = sadd.s32 %s29, 1
      %s31 = scalar_select %p28, %s29, %s30
      %p34 = pneg %p28
      %p35 = scmp.eq.s32.totalorder %s19, 3
      %p36 = por %p34, %p35
      %p37 = scmp.ne.s32.totalorder %s29, %s32
      %p38 = scmp.eq.s32.totalorder %s19, 0
      %p39 = por %p37, %p38
      %p40 = scmp.ne.s32.totalorder %s29, %s32
      %p41 = scmp.eq.s32.totalorder %s24, 3
      %p42 = por %p40, %p41
      %p43 = scmp.ne.s32.totalorder %s32, %s33
      %p44 = scmp.eq.s32.totalorder %s24, 0
      %p45 = por %p43, %p44
      %p46 = scmp.ne.s32.totalorder %s32, %s33
      %p47 = scmp.eq.s32.totalorder %s25, 3
      %p48 = por %p46, %p47
      %p50 = scmp.ne.s32.totalorder %s33, %s49
      %p51 = scmp.eq.s32.totalorder %s25, 0
      %p52 = por %p50, %p51
      %s54 = sadd.s32 %s53, 1
      %p57 = scmp.eq.s32.totalorder %s19, 3
      %p58 = scmp.ne.s32.totalorder %s53, %s55
      %p59 = scmp.eq.s32.totalorder %s19, 0
      %p60 = por %p58, %p59
      %p61 = scmp.ne.s32.totalorder %s53, %s55
      %p62 = scmp.eq.s32.totalorder %s24, 3
      %p63 = por %p61, %p62
      %p64 = scmp.ne.s32.totalorder %s55, %s56
      %p65 = scmp.eq.s32.totalorder %s24, 0
      %p66 = por %p64, %p65
      %p67 = scmp.ne.s32.totalorder %s55, %s56
      %p68 = scmp.eq.s32.totalorder %s25, 3
      %p69 = por %p67, %p68
      %p71 = scmp.ne.s32.totalorder %s56, %s70
      %p72 = scmp.eq.s32.totalorder %s25, 0
      %p73 = por %p71, %p72
      %s75 = sadd.s32 %s74, 1
      %p78 = scmp.eq.s32.totalorder %s19, 3
      %p79 = scmp.ne.s32.totalorder %s74, %s76
      %p80 = scmp.eq.s32.totalorder %s19, 0
      %p81 = por %p79, %p80
      %p82 = scmp.ne.s32.totalorder %s74, %s76
      %p83 = scmp.eq.s32.totalorder %s24, 3
      %p84 = por %p82, %p83
      %p85 = scmp.ne.s32.totalorder %s76, %s77
      %p86 = scmp.eq.s32.totalorder %s24, 0
      %p87 = por %p85, %p86
      %p88 = scmp.ne.s32.totalorder %s76, %s77
      %p89 = scmp.eq.s32.totalorder %s25, 3
      %p90 = por %p88, %p89
      %p92 = scmp.ne.s32.totalorder %s77, %s91
      %p93 = scmp.eq.s32.totalorder %s25, 0
      %p94 = por %p92, %p93
      %s96 = sadd.s32 %s95, 1
      %p99 = scmp.eq.s32.totalorder %s19, 3
      %p100 = scmp.ne.s32.totalorder %s95, %s97
      %p101 = scmp.eq.s32.totalorder %s19, 0
      %p102 = por %p100, %p101
      %p103 = scmp.ne.s32.totalorder %s95, %s97
      %p104 = scmp.eq.s32.totalorder %s24, 3
      %p105 = por %p103, %p104
      %p106 = scmp.ne.s32.totalorder %s97, %s98
      %p107 = scmp.eq.s32.totalorder %s24, 0
      %p108 = por %p106, %p107
      %p109 = scmp.ne.s32.totalorder %s97, %s98
      %p110 = scmp.eq.s32.totalorder %s25, 3
      %p111 = por %p109, %p110
      %p113 = scmp.ne.s32.totalorder %s98, %s112
      %p114 = scmp.eq.s32.totalorder %s25, 0
      %p115 = por %p113, %p114
      %s117 = sadd.s32 %s116, 1
      %p120 = scmp.eq.s32.totalorder %s19, 3
      %p121 = scmp.ne.s32.totalorder %s116, %s118
      %p122 = scmp.eq.s32.totalorder %s19, 0
      %p123 = por %p121, %p122
      %p124 = scmp.ne.s32.totalorder %s116, %s118
      %p125 = scmp.eq.s32.totalorder %s24, 3
      %p126 = por %p124, %p125
      %p127 = scmp.ne.s32.totalorder %s118, %s119
      %p128 = scmp.eq.s32.totalorder %s24, 0
      %p129 = por %p127, %p128
      %p130 = scmp.ne.s32.totalorder %s118, %s119
      %p131 = scmp.eq.s32.totalorder %s25, 3
      %p132 = por %p130, %p131
      %p134 = scmp.ne.s32.totalorder %s119, %s133
      %p135 = scmp.eq.s32.totalorder %s25, 0
      %p136 = por %p134, %p135
      %p137 = scmp.le.s32.totalorder 1, %s19
      %p138 = scmp.lt.s32.totalorder %s19, 5
      %p139 = pnand %p137, %p138
      %p140 = pneg %p139
      // Predicated region
      $region9: #{tpu_custom_call.1} parent=5 // pred_check
        _
      $region10: #{tpu_custom_call.1} parent=5 // pred_check_branch
        %142 = sbr.rel (%p139) target = $region12
      $region11: #{tpu_custom_call.1} parent=5 // pred_region
        %s143 = ssub.s32 %s19, 1
        // Predicated region
        $region13: #{tpu_custom_call.1} parent=11 // pred_check
          %p144 = pneg %p66
        $region14: #{tpu_custom_call.1} parent=11 // pred_check_branch
          %146 = sbr.rel (%p144) target = $region16
        $region15: #{tpu_custom_call.1} parent=11 // pred_region
          %s148 = ssub.s32 256, 256
          %149 = vsyncadd [#allocation11], %s148
          %s150 = sshll.u32 [#allocation10], 4
          %s151 = int_to_ptr.vmem [resolvable:$true] %s150
          %156 = dma.hbm_to_vmem [thread:$0]  %s2, 256, %s151, [#allocation11], 128, 128, 8
        $region16: #{tpu_custom_call.1} parent=11 // pred_fallthru
          _
        // Predicated region
        $region17: #{tpu_custom_call.1} parent=11 // pred_check
          %p157 = pneg %p87
        $region18: #{tpu_custom_call.1} parent=11 // pred_check_branch
          %159 = sbr.rel (%p157) target = $region20
        $region19: #{tpu_custom_call.1} parent=11 // pred_region
          %s161 = ssub.s32 16, 16
          %162 = vsyncadd [#allocation11], %s161
          %s164 = sshll.u32 [#allocation12], 4
          %s165 = int_to_ptr.vmem [resolvable:$true] %s164
          %167 = dma.hbm_to_vmem [thread:$0]  %s3, 16, %s165, [#allocation11]
        $region20: #{tpu_custom_call.1} parent=11 // pred_fallthru
          _
      $region12: #{tpu_custom_call.1} parent=5 // pred_fallthru
        _
      %p168 = scmp.lt.s32.totalorder %s19, 4
      // Predicated region
      $region21: #{tpu_custom_call.1} parent=5 // pred_check
        %p169 = pneg %p168
      $region22: #{tpu_custom_call.1} parent=5 // pred_check_branch
        %171 = sbr.rel (%p169) target = $region24
      $region23: #{tpu_custom_call.1} parent=5 // pred_region
        // Predicated region
        $region25: #{tpu_custom_call.1} parent=23 // pred_check
          %p172 = pneg %p39
        $region26: #{tpu_custom_call.1} parent=23 // pred_check_branch
          %174 = sbr.rel (%p172) target = $region28
        $region27: #{tpu_custom_call.1} parent=23 // pred_region
          %s175 = sand.u32 %s29, 1
          %s176 = scalar_lea.sflag [#allocation8], %s175
          %s177 = sand.u32 %s29, 1
          %s178 = smul.addr %s177, 8
          %s179 = scalar_lea.vmem [#allocation7], %s178
          %s181 = ssub.s32 128, 128
          %182 = vsyncadd %s176, %s181
          %s183 = smul.addr %s19, 128
          %s184 = scalar_lea.hbm %s1, %s183
          %s186 = sshll.u32 %s179, 4
          %s187 = int_to_ptr.vmem [resolvable:$true] %s186
          %189 = dma.hbm_to_vmem [thread:$0]  %s184, 128, %s187, %s176
        $region28: #{tpu_custom_call.1} parent=23 // pred_fallthru
          _
      $region24: #{tpu_custom_call.1} parent=5 // pred_fallthru
        _
      %p190 = scmp.le.s32.totalorder 1, %s19
      %p191 = scmp.lt.s32.totalorder %s19, 5
      %p192 = pnand %p190, %p191
      %p193 = pneg %p192
      // Predicated region
      $region29: #{tpu_custom_call.1} parent=5 // pred_check
        _
      $region30: #{tpu_custom_call.1} parent=5 // pred_check_branch
        %195 = sbr.rel (%p192) target = $region32
      $region31: #{tpu_custom_call.1} parent=5 // pred_region
        %s196 = ssub.s32 %s19, 1
        %s197 = sand.u32 %s32, 1
        %s198 = scalar_lea.sflag [#allocation8], %s197
        %s199 = sand.u32 %s32, 1
        %s200 = smul.addr %s199, 8
        %s201 = scalar_lea.vmem [#allocation7], %s200
        // Predicated region
        $region33: #{tpu_custom_call.1} parent=31 // pred_check
          %p202 = pneg %p45
        $region34: #{tpu_custom_call.1} parent=31 // pred_check_branch
          %204 = sbr.rel (%p202) target = $region36
        $region35: #{tpu_custom_call.1} parent=31 // pred_region
          %205 = dma.done %s198, 128
        $region36: #{tpu_custom_call.1} parent=31 // pred_fallthru
          _
        // Predicated region
        $region37: #{tpu_custom_call.1} parent=31 // pred_check
          %p206 = pneg %p66
        $region38: #{tpu_custom_call.1} parent=31 // pred_check_branch
          %208 = sbr.rel (%p206) target = $region40
        $region39: #{tpu_custom_call.1} parent=31 // pred_region
          %209 = dma.done [#allocation11], 256
        $region40: #{tpu_custom_call.1} parent=31 // pred_fallthru
          _
        // Predicated region
        $region41: #{tpu_custom_call.1} parent=31 // pred_check
          %p210 = pneg %p87
        $region42: #{tpu_custom_call.1} parent=31 // pred_check_branch
          %212 = sbr.rel (%p210) target = $region44
        $region43: #{tpu_custom_call.1} parent=31 // pred_region
          %213 = dma.done [#allocation11], 16
        $region44: #{tpu_custom_call.1} parent=31 // pred_fallthru
          _
        %s214 = sand.u32 %s32, 1
        %s215 = scalar_lea.sflag [#allocation8], %s214
        %s216 = sand.u32 %s32, 1
        %s217 = smul.addr %s216, 8
        %s218 = scalar_lea.vmem [#allocation7], %s217
        %p219 = pneg %p45
        %p220 = pneg %p42
        %p221 = pneg %p66
        %p222 = pneg %p63
        %p223 = pneg %p87
        %p224 = pneg %p84
        %p225 = pneg %p108
        %p226 = pneg %p105
        %p227 = pneg %p129
        %p228 = pneg %p126
        %p229 = scmp.eq.s32.totalorder %s24, 0
        // Predicated region
        $region45: #{tpu_custom_call.1} parent=31 // pred_check
          %p230 = pneg %p229
        $region46: #{tpu_custom_call.1} parent=31 // pred_check_branch
          %232 = sbr.rel (%p230) target = $region48
        $region47: #{tpu_custom_call.1} parent=31 // pred_region
          %s233 = sld [smem:[#allocation6]]
          %v234 = vld [vmem:[#allocation10] sm:$0xff]
          %v235 = vld [vmem:[#allocation10 + $0x8] sm:$0xff]
          %v236 = vld [vmem:[#allocation12] sm:$0x1]
          %v238 = vlaneseq
          %v239 = vshrl.u32 %v238, 7
          %v240 = vsub.s32 0, %v239
          %v241 = vrot.slane %v236, %v240
          %v243 = vsub.f32 %v234, %v241
          %v244 = vsub.f32 %v235, %v241
          %v245 = vstv %s233
          %v246 = vmul.f32 %v243, %v245
          %v247 = vmul.f32 %v244, %v245
          %248 = vmax.xlane.f32.xlu0 %v246
          %v249 = vpop.xlane.xlu0 %248
          %250 = vmax.xlane.f32.xlu0 %v247
          %v251 = vpop.xlane.xlu0 %250
          %v252 = vsub.f32 %v246, %v249
          %v253 = vsub.f32 %v247, %v251
          %v254 = vmul.f32 %v252, 1.442695
          %v255 = vpow.pop %v254
          %v256 = vmul.f32 %v253, 1.442695
          %v257 = vpow.pop %v256
          %258 = vadd.xlane.f32.xlu0 %v255
          %v259 = vpop.xlane.xlu0 %258
          %260 = vadd.xlane.f32.xlu0 %v257
          %v261 = vpop.xlane.xlu0 %260
          %v262 = vrcp.pop %v259
          %v263 = vrcp.pop %v261
          %v264 = vmul.f32 %v255, %v262
          %v265 = vmul.f32 %v257, %v263
          %266 = vst [vmem:[#allocation2] sm:$0xff] %v264
          %267 = vst [vmem:[#allocation2 + $0x8] sm:$0xff] %v265
          %v268 = vadd.f32 %v264, %v265
          %269 = vst [vmem:[#allocation3] sm:$0xff] %v268
          %vm270 = vcmask 7168
          %271 = vst.msk [vmem:[#allocation4] sm:$0xff] %vm270, 0.0
          %v272 = vld [vmem:[#allocation10] sm:$0xff]
          %v273 = vld [vmem:[#allocation10 + $0x8] sm:$0xff]
          %v274 = vadd.f32 %v272, %v273
          %v275 = vrot.slane %v274, 4
          %v276 = vadd.f32 %v274, %v275
          %v277 = vrot.slane %v276, 2
          %v278 = vadd.f32 %v276, %v277
          %v279 = vrot.slane %v278, 1
          %v280 = vadd.f32 %v278, %v279
          %v281 = vmul.f32 %v280, 0.0625
          %v282 = vld [vmem:[#allocation12] sm:$0x1]
          %v283 = vmul.f32 %v282, 0.9
          %v284 = vmul.f32 %v281, 0.1
          %v285 = vadd.f32 %v283, %v284
          %286 = vst [vmem:[#allocation14] sm:$0x1] %v285
        $region48: #{tpu_custom_call.1} parent=31 // pred_fallthru
          _
        %v287 = vld [vmem:[%s201] sm:$0xff]
        %288 = vmax.xlane.f32.xlu0 %v287
        %v289 = vpop.xlane.xlu0 %288
        %v290 = vsub.f32 %v287, %v289
        %v291 = vmul.f32 %v290, 10.0
        %v292 = vmul.f32 %v291, 1.442695
        %v293 = vpow.pop %v292
        %294 = vadd.xlane.f32.xlu0 %v293
        %v295 = vpop.xlane.xlu0 %294
        %v296 = vmul.f32 %v289, 10.0
        %v297 = vlog2.pop %v295
        %v298 = vmul.f32 %v297, 0.6931472
        %v299 = vadd.f32 %v296, %v298
        // Predicated region
        $region49: #{tpu_custom_call.1} parent=31 // pred_check
          %p300 = pneg %p229
        $region50: #{tpu_custom_call.1} parent=31 // pred_check_branch
          %302 = sbr.rel (%p300) target = $region52
        $region51: #{tpu_custom_call.1} parent=31 // pred_region
          %v303 = vld [vmem:[#allocation2 + $0x8] sm:$0xff]
          %v304 = vmul.f32 %v303, %v287
          %305 = vadd.xlane.f32.xlu0 %v304
          %v306 = vpop.xlane.xlu0 %305
          %v307 = vld [vmem:[#allocation4] sm:$0xff]
          %v308 = vmul.f32 %v306, 10.0
          %v309 = vsub.f32 %v299, %v308
          %v310 = vadd.f32 %v307, %v309
          %vm311 = vcmask 7168
          %312 = vst.msk [vmem:[#allocation4] sm:$0xff] %vm311, %v310
        $region52: #{tpu_custom_call.1} parent=31 // pred_fallthru
          _
        %p313 = scmp.eq.s32.totalorder %s24, 1
        // Predicated region
        $region53: #{tpu_custom_call.1} parent=31 // pred_check
          %p314 = pneg %p313
        $region54: #{tpu_custom_call.1} parent=31 // pred_check_branch
          %316 = sbr.rel (%p314) target = $region56
        $region55: #{tpu_custom_call.1} parent=31 // pred_region
          %v317 = vld [vmem:[#allocation2] sm:$0xff]
          %v318 = vmul.f32 %v317, %v287
          %319 = vadd.xlane.f32.xlu0 %v318
          %v320 = vpop.xlane.xlu0 %319
          %v321 = vld [vmem:[#allocation4] sm:$0xff]
          %v322 = vmul.f32 %v320, 10.0
          %v323 = vsub.f32 %v299, %v322
          %v324 = vadd.f32 %v321, %v323
          %vm325 = vcmask 7168
          %326 = vst.msk [vmem:[#allocation4] sm:$0xff] %vm325, %v324
        $region56: #{tpu_custom_call.1} parent=31 // pred_fallthru
          _
        %p327 = scmp.ge.s32.totalorder %s24, 2
        // Predicated region
        $region57: #{tpu_custom_call.1} parent=31 // pred_check
          %p328 = pneg %p327
        $region58: #{tpu_custom_call.1} parent=31 // pred_check_branch
          %330 = sbr.rel (%p328) target = $region60
        $region59: #{tpu_custom_call.1} parent=31 // pred_region
          %v331 = vld [vmem:[#allocation3] sm:$0xff]
          %v332 = vmul.f32 %v331, %v287
          %333 = vadd.xlane.f32.xlu0 %v332
          %v334 = vpop.xlane.xlu0 %333
          %v335 = vld [vmem:[#allocation4] sm:$0xff]
          %v336 = vmul.f32 %v299, 2.0
          %v337 = vmul.f32 %v334, 10.0
          %v338 = vsub.f32 %v336, %v337
          %v339 = vadd.f32 %v335, %v338
          %vm340 = vcmask 7168
          %341 = vst.msk [vmem:[#allocation4] sm:$0xff] %vm340, %v339
        $region60: #{tpu_custom_call.1} parent=31 // pred_fallthru
          _
        %p342 = scmp.eq.s32.totalorder %s24, 3
        // Predicated region
        $region61: #{tpu_custom_call.1} parent=31 // pred_check
          %p343 = pneg %p342
        $region62: #{tpu_custom_call.1} parent=31 // pred_check_branch
          %345 = sbr.rel (%p343) target = $region64
        $region63: #{tpu_custom_call.1} parent=31 // pred_region
          %v346 = vld [vmem:[#allocation4] sm:$0xff]
          %vm347 = vcmask 7168
          %v348 = vsel %vm347, %v346, 0.0
          %349 = vadd.xlane.f32.xlu0 %v348
          %v350 = vpop.xlane.xlu0 %349
          %v351 = vrot.slane %v350, 4
          %v352 = vadd.f32 %v350, %v351
          %v353 = vrot.slane %v352, 2
          %v354 = vadd.f32 %v352, %v353
          %v355 = vrot.slane %v354, 1
          %v356 = vadd.f32 %v354, %v355
          %s357 = vtos %v356
          %s358 = smul.f32 %s357, 0.020833334
          %v359 = vstv %s358
          %vm360 = vcmask 0
          %361 = vst.msk [vmem:[#allocation13] sm:$0x1] %vm360, %v359
        $region64: #{tpu_custom_call.1} parent=31 // pred_fallthru
          _
        // Predicated region
        $region65: #{tpu_custom_call.1} parent=31 // pred_check
          %p362 = pneg %p105
        $region66: #{tpu_custom_call.1} parent=31 // pred_check_branch
          %364 = sbr.rel (%p362) target = $region68
        $region67: #{tpu_custom_call.1} parent=31 // pred_region
          %s366 = ssub.s32 16, 16
          %367 = vsyncadd [#allocation9], %s366
          %s369 = sshll.u32 [#allocation13], 4
          %s370 = int_to_ptr.vmem [resolvable:$true] %s369
          %372 = dma.vmem_to_hbm [thread:$0]  %s370, 16, %s4, [#allocation9]
        $region68: #{tpu_custom_call.1} parent=31 // pred_fallthru
          _
        // Predicated region
        $region69: #{tpu_custom_call.1} parent=31 // pred_check
          %p373 = pneg %p126
        $region70: #{tpu_custom_call.1} parent=31 // pred_check_branch
          %375 = sbr.rel (%p373) target = $region72
        $region71: #{tpu_custom_call.1} parent=31 // pred_region
          %s377 = ssub.s32 16, 16
          %378 = vsyncadd [#allocation15], %s377
          %s380 = sshll.u32 [#allocation14], 4
          %s381 = int_to_ptr.vmem [resolvable:$true] %s380
          %383 = dma.vmem_to_hbm [thread:$0]  %s381, 16, %s5, [#allocation15]
        $region72: #{tpu_custom_call.1} parent=31 // pred_fallthru
          _
        // Predicated region
        $region73: #{tpu_custom_call.1} parent=31 // pred_check
          %p384 = pneg %p105
        $region74: #{tpu_custom_call.1} parent=31 // pred_check_branch
          %386 = sbr.rel (%p384) target = $region76
        $region75: #{tpu_custom_call.1} parent=31 // pred_region
          %387 = dma.done [#allocation9], 16
        $region76: #{tpu_custom_call.1} parent=31 // pred_fallthru
          _
        // Predicated region
        $region77: #{tpu_custom_call.1} parent=31 // pred_check
          %p388 = pneg %p126
        $region78: #{tpu_custom_call.1} parent=31 // pred_check_branch
          %390 = sbr.rel (%p388) target = $region80
        $region79: #{tpu_custom_call.1} parent=31 // pred_region
          %391 = dma.done [#allocation15], 16
        $region80: #{tpu_custom_call.1} parent=31 // pred_fallthru
          _
      $region32: #{tpu_custom_call.1} parent=5 // pred_fallthru
        _
      %p392 = scmp.le.s32.totalorder 2, %s19
      // Predicated region
      $region81: #{tpu_custom_call.1} parent=5 // pred_check
        %p393 = pneg %p392
      $region82: #{tpu_custom_call.1} parent=5 // pred_check_branch
        %395 = sbr.rel (%p393) target = $region84
      $region83: #{tpu_custom_call.1} parent=5 // pred_region
        %s396 = ssub.s32 %s19, 2
      $region84: #{tpu_custom_call.1} parent=5 // pred_fallthru
        _
    $region6: #{tpu_custom_call.1} parent=1 // loop_footer
      %s23 = sadd.s32 1, %s19
    $region7: #{tpu_custom_call.1} parent=1 // loop_footer_branch
      %18 = sbr.rel target = $region3
    $region8: #{tpu_custom_call.1} parent=1 // loop_exit
      _
    %397 = vsyncpa [#allocation8], 1
    %s398 = scalar_lea.sflag [#allocation8], 1
    %399 = vsyncpa %s398, 1
    %400 = vsyncpa [#allocation11], 1
    %401 = vsyncpa [#allocation9], 1
    %s402 = scalar_lea.sflag [#allocation9], 1
    %403 = vsyncpa %s402, 1
    %404 = vsyncpa [#allocation15], 1

</llo_original>
